<compile_context>
chip_gen: v5e
topology: v5e:2x2
jax: 0.10.0
libtpu: 0.0.40
codegen_flags: <defaults>
</compile_context>

<pallas_src>
import functools

import jax
import jax.numpy as jnp
from jax import lax
from jax.experimental import pallas as pl
from jax.experimental.pallas import tpu as pltpu


def spatial_attention_kernel(x_ref, wmax_ref, wavg_ref, o_ref):
    x = x_ref[...]                                   # (Bb, C, N) float32
    inv_n = 1.0 / x.shape[-1]
    mx = jnp.max(x, axis=-1)                         # (Bb, C)  AdaptiveMaxPool1d(1)
    av = jnp.sum(x, axis=-1) * inv_n                 # (Bb, C)  AdaptiveAvgPool1d(1)
    # Conv1d(2->1, k, pad=(k-1)//2, bias=False) along the channel axis, folded into
    # two banded (C, C) weight matrices -> two MXU matmuls, no concat needed.
    logits = (jnp.dot(mx, wmax_ref[...], precision=lax.Precision.HIGHEST,
                      preferred_element_type=jnp.float32)
              + jnp.dot(av, wavg_ref[...], precision=lax.Precision.HIGHEST,
                        preferred_element_type=jnp.float32))       # (Bb, C)
    o_ref[...] = 1.0 / (1.0 + jnp.exp(-logits))      # sigmoid


def _conv_to_bands(conv_w, C):
    """Fold Conv1d(2->1, K, pad=(K-1)//2, bias=False) into two (C, C) banded mats.

    PyTorch cross-correlation with zero padding gives
      out[b, c] = sum_j max[b, j] * w[0, 0, j - c + pad]
                + sum_j avg[b, j] * w[0, 1, j - c + pad],   0 <= j - c + pad < K
    so band_ch[j, c] = w[0, ch, j - c + pad] on the band, 0 elsewhere.
    """
    K = conv_w.shape[-1]
    pad = (K - 1) // 2
    j = jnp.arange(C)[:, None]          # pooled-vector index (input position)
    c = jnp.arange(C)[None, :]          # output position
    t = j - c + pad
    valid = (t >= 0) & (t < K)
    tc = jnp.clip(t, 0, K - 1)
    w_max = jnp.where(valid, conv_w[0, 0][tc], 0.0).astype(jnp.float32)   # (C, C)
    w_avg = jnp.where(valid, conv_w[0, 1][tc], 0.0).astype(jnp.float32)   # (C, C)
    return w_max, w_avg


@functools.partial(jax.jit, static_argnames=("batch_block",))
def spatial_attention_forward(x, conv_w, *, batch_block=None):
    B, C, N = x.shape
    w_max, w_avg = _conv_to_bands(conv_w, C)

    # Whole batch per step for small B; 8-row (sublane-aligned) blocks otherwise.
    Bb = batch_block if batch_block is not None else (B if B <= 8 else 8)
    Bp = ((B + Bb - 1) // Bb) * Bb
    xf = x.astype(jnp.float32)
    if Bp != B:
        xf = jnp.pad(xf, ((0, Bp - B), (0, 0), (0, 0)))
    grid = (Bp // Bb,)

    out2d = pl.pallas_call(
        spatial_attention_kernel,
        out_shape=jax.ShapeDtypeStruct((Bp, C), jnp.float32),
        grid_spec=pltpu.PrefetchScalarGridSpec(
            num_scalar_prefetch=0,
            grid=grid,
            in_specs=[
                pl.BlockSpec((Bb, C, N), lambda i: (i, 0, 0)),
                pl.BlockSpec((C, C), lambda i: (0, 0)),
                pl.BlockSpec((C, C), lambda i: (0, 0)),
            ],
            out_specs=pl.BlockSpec((Bb, C), lambda i: (i, 0)),
        ),
        compiler_params=pltpu.CompilerParams(
            dimension_semantics=("parallel",)),
    )(xf, w_max, w_avg)
    return out2d[:B, :, None]            # (B, C, 1) to match the PyTorch module


def spatial_attention_ref(x, conv_w):
    """Pure-JAX reference of the PyTorch forward (independent formulation)."""
    mx = jnp.max(x, axis=-1, keepdims=True)             # (B, C, 1)
    av = jnp.mean(x, axis=-1, keepdims=True)            # (B, C, 1)
    cat = jnp.concatenate([mx, av], axis=-1)             # (B, C, 2)
    inp = jnp.transpose(cat, (0, 2, 1))                  # (B, 2, C)
    pad = (conv_w.shape[-1] - 1) // 2
    conv = lax.conv_general_dilated(
        inp, conv_w, window_strides=(1,), padding=[(pad, pad)],
        dimension_numbers=("NCH", "OIH", "NCH"),
        precision=lax.Precision.HIGHEST)                  # (B, 1, C)
    return jax.nn.sigmoid(jnp.transpose(conv, (0, 2, 1)))   # (B, C, 1)


if __name__ == "__main__":
    B, C, N = 2, 32, 16          # (batch, channels, sequence length)
    K = 7                        # SpatialAttention default kernel_size
    key = jax.random.PRNGKey(0)
    kx, kw = jax.random.split(key)
    x = jax.random.normal(kx, (B, C, N), dtype=jnp.float32)
    bound = 1.0 / (2 * K) ** 0.5     # PyTorch Conv1d default init range
    conv_w = jax.random.uniform(kw, (1, 2, K), minval=-bound, maxval=bound,
                                dtype=jnp.float32)

    out = jax.block_until_ready(spatial_attention_forward(x, conv_w))
    assert out.shape == (B, C, 1), out.shape
    assert bool(jnp.all(jnp.isfinite(out)))

    ref = jax.block_until_ready(spatial_attention_ref(x, conv_w))
    max_err = float(jnp.max(jnp.abs(out - ref)))
    assert max_err < 5e-3, f"mismatch vs pure-JAX reference: max_err={max_err}"

    print("KERNEL_OK")
</pallas_src>

<mosaic_0001>
module attributes {stable_mosaic.version = 11 : i64} {
  func.func @spatial_attention_kernel(%arg0: i32, %arg1: memref<2x32x16xf32, #tpu.memory_space<vmem>>, %arg2: memref<32x32xf32, #tpu.memory_space<vmem>>, %arg3: memref<32x32xf32, #tpu.memory_space<vmem>>, %arg4: memref<2x32xf32, #tpu.memory_space<vmem>>) attributes {dimension_semantics = [#tpu.dimension_semantics<parallel>], iteration_bounds = array<i64: 1>, scalar_prefetch = 0 : i64, scratch_operands = 0 : i64, tpu.core_type = #tpu.core_type<tc>, window_params = [{transform_indices = @transform_0, window_bounds = array<i64: 2, 32, 16>}, {pipeline_mode = #tpu.pipeline_mode<synchronous>, transform_indices = @transform_1, window_bounds = array<i64: 32, 32>}, {pipeline_mode = #tpu.pipeline_mode<synchronous>, transform_indices = @transform_2, window_bounds = array<i64: 32, 32>}, {transform_indices = @transform_3, window_bounds = array<i64: 2, 32>}]} {
    %c0 = arith.constant 0 : index
    %c0_0 = arith.constant 0 : index
    %c0_1 = arith.constant 0 : index
    %0 = vector.load %arg1[%c0, %c0_0, %c0_1] : memref<2x32x16xf32, #tpu.memory_space<vmem>>, vector<2x32x16xf32>
    %cst = arith.constant dense<0xFF800000> : vector<2x32xf32>
    %1 = vector.multi_reduction <maximumf>, %0, %cst [2] : vector<2x32x16xf32> to vector<2x32xf32>
    %cst_2 = arith.constant dense<0.000000e+00> : vector<2x32xf32>
    %2 = vector.multi_reduction <add>, %0, %cst_2 [2] : vector<2x32x16xf32> to vector<2x32xf32>
    %cst_3 = arith.constant 6.250000e-02 : f32
    %3 = vector.broadcast %cst_3 : f32 to vector<2x32xf32>
    %4 = arith.mulf %2, %3 : vector<2x32xf32>
    %c0_4 = arith.constant 0 : index
    %c0_5 = arith.constant 0 : index
    %5 = vector.load %arg2[%c0_4, %c0_5] : memref<32x32xf32, #tpu.memory_space<vmem>>, vector<32x32xf32>
    %cst_6 = arith.constant dense<0.000000e+00> : vector<2x32xf32>
    %6 = tpu.matmul %1, %5, %cst_6 {dimension_numbers = #tpu.dot_dimension_numbers<[1], [0], [0], [1], [0, 0, 1, 1], [], []>, precision = #tpu.contract_precision<fp32>} : vector<2x32xf32>, vector<32x32xf32>, vector<2x32xf32> -> vector<2x32xf32>
    %c0_7 = arith.constant 0 : index
    %c0_8 = arith.constant 0 : index
    %7 = vector.load %arg3[%c0_7, %c0_8] : memref<32x32xf32, #tpu.memory_space<vmem>>, vector<32x32xf32>
    %cst_9 = arith.constant dense<0.000000e+00> : vector<2x32xf32>
    %8 = tpu.matmul %4, %7, %cst_9 {dimension_numbers = #tpu.dot_dimension_numbers<[1], [0], [0], [1], [0, 0, 1, 1], [], []>, precision = #tpu.contract_precision<fp32>} : vector<2x32xf32>, vector<32x32xf32>, vector<2x32xf32> -> vector<2x32xf32>
    %9 = arith.addf %6, %8 : vector<2x32xf32>
    %cst_10 = arith.constant 0.000000e+00 : f32
    %10 = vector.broadcast %cst_10 : f32 to vector<2x32xf32>
    %11 = arith.subf %10, %9 : vector<2x32xf32>
    %12 = math.exp %11 : vector<2x32xf32>
    %cst_11 = arith.constant 1.000000e+00 : f32
    %13 = vector.broadcast %cst_11 : f32 to vector<2x32xf32>
    %14 = arith.addf %13, %12 : vector<2x32xf32>
    %cst_12 = arith.constant 1.000000e+00 : f32
    %15 = vector.broadcast %cst_12 : f32 to vector<2x32xf32>
    %16 = arith.divf %15, %14 : vector<2x32xf32>
    %c0_13 = arith.constant 0 : index
    %c0_14 = arith.constant 0 : index
    %17 = vector.load %arg4[%c0_13, %c0_14] : memref<2x32xf32, #tpu.memory_space<vmem>>, vector<2x32xf32>
    tpu.vector_store %arg4[%c0_13, %c0_14], %16 {strides = array<i32>} : memref<2x32xf32, #tpu.memory_space<vmem>>, vector<2x32xf32>,
    return
  }
  func.func @transform_0(%arg0: i32) -> (i32, i32, i32) {
    %c0_i32 = arith.constant 0 : i32
    %c0_i32_0 = arith.constant 0 : i32
    %c0_i32_1 = arith.constant 0 : i32
    return %arg0, %c0_i32, %c0_i32_0 : i32, i32, i32
  }
  func.func @transform_1(%arg0: i32) -> (i32, i32) {
    %c0_i32 = arith.constant 0 : i32
    %c0_i32_0 = arith.constant 0 : i32
    %c0_i32_1 = arith.constant 0 : i32
    return %c0_i32, %c0_i32_0 : i32, i32
  }
  func.func @transform_2(%arg0: i32) -> (i32, i32) {
    %c0_i32 = arith.constant 0 : i32
    %c0_i32_0 = arith.constant 0 : i32
    %c0_i32_1 = arith.constant 0 : i32
    return %c0_i32, %c0_i32_0 : i32, i32
  }
  func.func @transform_3(%arg0: i32) -> (i32, i32) {
    %c0_i32 = arith.constant 0 : i32
    %c0_i32_0 = arith.constant 0 : i32
    return %arg0, %c0_i32 : i32, i32
  }
}

</mosaic_0001>

<llo_original>
// kernel: spatial_attention_forward.1
$region0: #{spatial_attention_forward.1}
  #allocation0 [shape = 'u32[]', space=smem, size = 0x4, offset = 0x4, fixed_abs, tag = 'smem constant byte address 0x4 - core index']
  #allocation1 [shape = 'u32[72,128]{1,0:T(1,128)}', space=vmem, size = 0x9000, scoped, tag = 'internal scratch']
  %s0 = inlined_call_operand.vmem [shape: f32[2,32,16], index: 0, kind: input, shape index: {}]
  %s1 = inlined_call_operand.vmem [shape: f32[32,32], index: 1, kind: input, shape index: {}]
  %s2 = inlined_call_operand.vmem [shape: f32[32,32], index: 2, kind: input, shape index: {}]
  %s3 = inlined_call_operand.hbm [shape: f32[2,32], index: 3, kind: output, shape index: {}]
  %s4 = sld [smem:[#allocation0]]
  $region22: #{spatial_attention_forward.1} parent=0
    _
  %s6 = ssub.s32 1, %s4
  %s7 = scalar_select 0, %s6, %s4
  $region1: #{spatial_attention_forward.1} parent=0
    #allocation2 [shape = 'u8[1024]{0}', space=vmem, size = 0x400, scoped, tag = 'output window, operand 0, single buffered']
    #allocation3 [shape = 's32[1]{0}', space=sflag, size = 0x4, scoped, tag = 'scoped memory for spatial_attention_forward.1']
    %8 = vsyncpa [#allocation3], 0
    // Predicated region
    $region2: #{spatial_attention_forward.1} parent=1 // pred_check
      _
    $region3: #{spatial_attention_forward.1} parent=1 // pred_check_branch
      %10 = sbr.rel (0) target = $region5
    $region4: #{spatial_attention_forward.1} parent=1 // pred_region
      _
    $region5: #{spatial_attention_forward.1} parent=1 // pred_fallthru
      _
    // Predicated region
    $region6: #{spatial_attention_forward.1} parent=1 // pred_check
      _
    $region7: #{spatial_attention_forward.1} parent=1 // pred_check_branch
      %12 = sbr.rel (0) target = $region9
    $region8: #{spatial_attention_forward.1} parent=1 // pred_region
      _
    $region9: #{spatial_attention_forward.1} parent=1 // pred_fallthru
      _
    // Predicated region
    $region10: #{spatial_attention_forward.1} parent=1 // pred_check
      _
    $region11: #{spatial_attention_forward.1} parent=1 // pred_check_branch
      %14 = sbr.rel (0) target = $region13
    $region12: #{spatial_attention_forward.1} parent=1 // pred_region
      _
    $region13: #{spatial_attention_forward.1} parent=1 // pred_fallthru
      _
    %v15 = vld [vmem:[%s0] sm:$0xff]
    %v16 = vld [vmem:[%s0 + $0x8] sm:$0xff]
    %v17 = vld [vmem:[%s0 + $0x10] sm:$0xff]
    %v18 = vld [vmem:[%s0 + $0x18] sm:$0xff]
    %v19 = vld [vmem:[%s0 + $0x20] sm:$0xff]
    %v20 = vld [vmem:[%s0 + $0x28] sm:$0xff]
    %v21 = vld [vmem:[%s0 + $0x30] sm:$0xff]
    %v22 = vld [vmem:[%s0 + $0x38] sm:$0xff]
    %vm23 = vcmask 130048
    %v24 = vsel %vm23, %v15, -inf
    %25 = vmax.xlane.f32.xlu0 %v24
    %v26 = vpop.xlane.xlu0 %25
    %v27 = vsel %vm23, %v16, -inf
    %28 = vmax.xlane.f32.xlu0 %v27
    %v29 = vpop.xlane.xlu0 %28
    %v30 = vsel %vm23, %v17, -inf
    %31 = vmax.xlane.f32.xlu0 %v30
    %v32 = vpop.xlane.xlu0 %31
    %v33 = vsel %vm23, %v18, -inf
    %34 = vmax.xlane.f32.xlu0 %v33
    %v35 = vpop.xlane.xlu0 %34
    %v36 = vsel %vm23, %v19, -inf
    %37 = vmax.xlane.f32.xlu0 %v36
    %v38 = vpop.xlane.xlu0 %37
    %v39 = vsel %vm23, %v20, -inf
    %40 = vmax.xlane.f32.xlu0 %v39
    %v41 = vpop.xlane.xlu0 %40
    %v42 = vsel %vm23, %v21, -inf
    %43 = vmax.xlane.f32.xlu0 %v42
    %v44 = vpop.xlane.xlu0 %43
    %v45 = vsel %vm23, %v22, -inf
    %46 = vmax.xlane.f32.xlu0 %v45
    %v47 = vpop.xlane.xlu0 %46
    %v48 = vsel %vm23, %v15, 0.0
    %49 = vadd.xlane.f32.xlu0 %v48
    %v50 = vpop.xlane.xlu0 %49
    %v51 = vsel %vm23, %v16, 0.0
    %52 = vadd.xlane.f32.xlu0 %v51
    %v53 = vpop.xlane.xlu0 %52
    %v54 = vsel %vm23, %v17, 0.0
    %55 = vadd.xlane.f32.xlu0 %v54
    %v56 = vpop.xlane.xlu0 %55
    %v57 = vsel %vm23, %v18, 0.0
    %58 = vadd.xlane.f32.xlu0 %v57
    %v59 = vpop.xlane.xlu0 %58
    %v60 = vsel %vm23, %v19, 0.0
    %61 = vadd.xlane.f32.xlu0 %v60
    %v62 = vpop.xlane.xlu0 %61
    %v63 = vsel %vm23, %v20, 0.0
    %64 = vadd.xlane.f32.xlu0 %v63
    %v65 = vpop.xlane.xlu0 %64
    %v66 = vsel %vm23, %v21, 0.0
    %67 = vadd.xlane.f32.xlu0 %v66
    %v68 = vpop.xlane.xlu0 %67
    %v69 = vsel %vm23, %v22, 0.0
    %70 = vadd.xlane.f32.xlu0 %v69
    %v71 = vpop.xlane.xlu0 %70
    %v72 = vmul.f32 %v50, 0.0625
    %v73 = vmul.f32 %v53, 0.0625
    %v74 = vmul.f32 %v56, 0.0625
    %v75 = vmul.f32 %v59, 0.0625
    %v76 = vmul.f32 %v62, 0.0625
    %v77 = vmul.f32 %v65, 0.0625
    %v78 = vmul.f32 %v68, 0.0625
    %v79 = vmul.f32 %v71, 0.0625
    %v80 = vld [vmem:[%s1] sm:$0xff]
    %v81 = vld [vmem:[%s1 + $0x8] sm:$0xff]
    %v82 = vld [vmem:[%s1 + $0x10] sm:$0xff]
    %v83 = vld [vmem:[%s1 + $0x18] sm:$0xff]
    %v84 = vld [vmem:[%s2] sm:$0xff]
    %v85 = vld [vmem:[%s2 + $0x8] sm:$0xff]
    %v86 = vld [vmem:[%s2 + $0x10] sm:$0xff]
    %v87 = vld [vmem:[%s2 + $0x18] sm:$0xff]
    %v96 = vlaneseq
    %v97 = vand.u32 %v96, 127
    %v98 = vperm.slane %v72, %v97
    %v99 = vadd.s32 %v97, 4294967288
    %v100 = vperm.slane %v73, %v99
    %vm101 = vcmask 130112
    %v102 = vsel %vm101, %v100, %v98
    %v103 = vadd.s32 %v97, 4294967280
    %v104 = vperm.slane %v74, %v103
    %vm105 = vcmask 195712
    %v106 = vsel %vm105, %v104, %v102
    %v107 = vadd.s32 %v97, 4294967272
    %v108 = vperm.slane %v75, %v107
    %vm109 = vcmask 261312
    %v110 = vsel %vm109, %v108, %v106
    %v111 = vperm.slane %v76, %v97
    %v112 = vperm.slane %v77, %v99
    %v113 = vsel %vm101, %v112, %v111
    %v114 = vperm.slane %v78, %v103
    %v115 = vsel %vm105, %v114, %v113
    %v116 = vperm.slane %v79, %v107
    %v117 = vsel %vm109, %v116, %v115
    %vm118 = vcmask 1041409
    %v119 = vsel %vm118, %v117, %v110
    %vm120 = vcmask 261120
    %v121 = vsel %vm120, %v119, 0
    %123 = vmatpush.msra.mxu0 0.0
    %124 = vmatpush.msra.mxu0 0.0
    %125 = vmatpush.msra.mxu0 0.0
    %126 = vmatpush.msra.mxu0 0.0
    %127 = vmatpush.msra.mxu0 0.0
    %128 = vmatpush.msra.mxu0 0.0
    %129 = vmatpush.msra.mxu0 0.0
    %130 = vmatpush.msra.mxu0 0.0
    %131 = vmatpush.msra.mxu0 0.0
    %132 = vmatpush.msra.mxu0 0.0
    %133 = vmatpush.msra.mxu0 0.0
    %134 = vmatpush.msra.mxu0 0.0
    %v135 = vand.u32 %v87, 4294901760
    %136 = vmatpush.msra.mxu0 %v135
    %v137 = vand.u32 %v86, 4294901760
    %138 = vmatpush.msra.mxu0 %v137
    %v139 = vand.u32 %v85, 4294901760
    %140 = vmatpush.msra.mxu0 %v139
    %v141 = vand.u32 %v84, 4294901760
    %142 = vmatpush.msra.mxu0 %v141
    %v143 = vand.u32 %v121, 4294901760
    %v144 = vsub.f32 %v121, %v143
    %v145 = vand.u32 %v144, 4294901760
    %v146 = vsub.f32 %v144, %v145
    %v147 = vand.u32 %v146, 4294901760
    %148 = vmatmul.f32.gmra.mxu0 %v147
    %v149 = vpop.f32.mrf.mxu0
    %v150 = vadd.f32 0.0, %v149
    %151 = vdwg.mxu0
    %152 = vmatpush.msra.mxu0 0.0
    %153 = vmatpush.msra.mxu0 0.0
    %154 = vmatpush.msra.mxu0 0.0
    %155 = vmatpush.msra.mxu0 0.0
    %156 = vmatpush.msra.mxu0 0.0
    %157 = vmatpush.msra.mxu0 0.0
    %158 = vmatpush.msra.mxu0 0.0
    %159 = vmatpush.msra.mxu0 0.0
    %160 = vmatpush.msra.mxu0 0.0
    %161 = vmatpush.msra.mxu0 0.0
    %162 = vmatpush.msra.mxu0 0.0
    %163 = vmatpush.msra.mxu0 0.0
    %v164 = vand.u32 %v87, 4294901760
    %v165 = vsub.f32 %v87, %v164
    %v166 = vand.u32 %v165, 4294901760
    %v167 = vsub.f32 %v165, %v166
    %v168 = vand.u32 %v167, 4294901760
    %169 = vmatpush.msra.mxu0 %v168
    %v170 = vand.u32 %v86, 4294901760
    %v171 = vsub.f32 %v86, %v170
    %v172 = vand.u32 %v171, 4294901760
    %v173 = vsub.f32 %v171, %v172
    %v174 = vand.u32 %v173, 4294901760
    %175 = vmatpush.msra.mxu0 %v174
    %v176 = vand.u32 %v85, 4294901760
    %v177 = vsub.f32 %v85, %v176
    %v178 = vand.u32 %v177, 4294901760
    %v179 = vsub.f32 %v177, %v178
    %v180 = vand.u32 %v179, 4294901760
    %181 = vmatpush.msra.mxu0 %v180
    %v182 = vand.u32 %v84, 4294901760
    %v183 = vsub.f32 %v84, %v182
    %v184 = vand.u32 %v183, 4294901760
    %v185 = vsub.f32 %v183, %v184
    %v186 = vand.u32 %v185, 4294901760
    %187 = vmatpush.msra.mxu0 %v186
    %v188 = vand.u32 %v121, 4294901760
    %189 = vmatmul.f32.gmra.mxu0 %v188
    %v190 = vpop.f32.mrf.mxu0
    %v191 = vadd.f32 %v150, %v190
    %192 = vdwg.mxu0
    %193 = vmatpush.msra.mxu0 0.0
    %194 = vmatpush.msra.mxu0 0.0
    %195 = vmatpush.msra.mxu0 0.0
    %196 = vmatpush.msra.mxu0 0.0
    %197 = vmatpush.msra.mxu0 0.0
    %198 = vmatpush.msra.mxu0 0.0
    %199 = vmatpush.msra.mxu0 0.0
    %200 = vmatpush.msra.mxu0 0.0
    %201 = vmatpush.msra.mxu0 0.0
    %202 = vmatpush.msra.mxu0 0.0
    %203 = vmatpush.msra.mxu0 0.0
    %204 = vmatpush.msra.mxu0 0.0
    %v205 = vand.u32 %v87, 4294901760
    %v206 = vsub.f32 %v87, %v205
    %207 = vmatpush.msra.mxu0 %v206
    %v208 = vand.u32 %v86, 4294901760
    %v209 = vsub.f32 %v86, %v208
    %210 = vmatpush.msra.mxu0 %v209
    %v211 = vand.u32 %v85, 4294901760
    %v212 = vsub.f32 %v85, %v211
    %213 = vmatpush.msra.mxu0 %v212
    %v214 = vand.u32 %v84, 4294901760
    %v215 = vsub.f32 %v84, %v214
    %216 = vmatpush.msra.mxu0 %v215
    %v217 = vand.u32 %v121, 4294901760
    %v218 = vsub.f32 %v121, %v217
    %219 = vmatmul.f32.gmra.mxu0 %v218
    %v220 = vpop.f32.mrf.mxu0
    %v221 = vadd.f32 %v191, %v220
    %222 = vdwg.mxu0
    %223 = vmatpush.msra.mxu0 0.0
    %224 = vmatpush.msra.mxu0 0.0
    %225 = vmatpush.msra.mxu0 0.0
    %226 = vmatpush.msra.mxu0 0.0
    %227 = vmatpush.msra.mxu0 0.0
    %228 = vmatpush.msra.mxu0 0.0
    %229 = vmatpush.msra.mxu0 0.0
    %230 = vmatpush.msra.mxu0 0.0
    %231 = vmatpush.msra.mxu0 0.0
    %232 = vmatpush.msra.mxu0 0.0
    %233 = vmatpush.msra.mxu0 0.0
    %234 = vmatpush.msra.mxu0 0.0
    %v235 = vand.u32 %v87, 4294901760
    %236 = vmatpush.msra.mxu0 %v235
    %v237 = vand.u32 %v86, 4294901760
    %238 = vmatpush.msra.mxu0 %v237
    %v239 = vand.u32 %v85, 4294901760
    %240 = vmatpush.msra.mxu0 %v239
    %v241 = vand.u32 %v84, 4294901760
    %242 = vmatpush.msra.mxu0 %v241
    %v243 = vand.u32 %v121, 4294901760
    %v244 = vsub.f32 %v121, %v243
    %v245 = vand.u32 %v244, 4294901760
    %246 = vmatmul.f32.gmra.mxu0 %v245
    %v247 = vpop.f32.mrf.mxu0
    %v248 = vadd.f32 %v221, %v247
    %249 = vdwg.mxu0
    %250 = vmatpush.msra.mxu0 0.0
    %251 = vmatpush.msra.mxu0 0.0
    %252 = vmatpush.msra.mxu0 0.0
    %253 = vmatpush.msra.mxu0 0.0
    %254 = vmatpush.msra.mxu0 0.0
    %255 = vmatpush.msra.mxu0 0.0
    %256 = vmatpush.msra.mxu0 0.0
    %257 = vmatpush.msra.mxu0 0.0
    %258 = vmatpush.msra.mxu0 0.0
    %259 = vmatpush.msra.mxu0 0.0
    %260 = vmatpush.msra.mxu0 0.0
    %261 = vmatpush.msra.mxu0 0.0
    %v262 = vand.u32 %v87, 4294901760
    %v263 = vsub.f32 %v87, %v262
    %v264 = vand.u32 %v263, 4294901760
    %265 = vmatpush.msra.mxu0 %v264
    %v266 = vand.u32 %v86, 4294901760
    %v267 = vsub.f32 %v86, %v266
    %v268 = vand.u32 %v267, 4294901760
    %269 = vmatpush.msra.mxu0 %v268
    %v270 = vand.u32 %v85, 4294901760
    %v271 = vsub.f32 %v85, %v270
    %v272 = vand.u32 %v271, 4294901760
    %273 = vmatpush.msra.mxu0 %v272
    %v274 = vand.u32 %v84, 4294901760
    %v275 = vsub.f32 %v84, %v274
    %v276 = vand.u32 %v275, 4294901760
    %277 = vmatpush.msra.mxu0 %v276
    %v278 = vand.u32 %v121, 4294901760
    %279 = vmatmul.f32.gmra.mxu0 %v278
    %v280 = vpop.f32.mrf.mxu0
    %v281 = vadd.f32 %v248, %v280
    %282 = vdwg.mxu0
    %283 = vmatpush.msra.mxu0 0.0
    %284 = vmatpush.msra.mxu0 0.0
    %285 = vmatpush.msra.mxu0 0.0
    %286 = vmatpush.msra.mxu0 0.0
    %287 = vmatpush.msra.mxu0 0.0
    %288 = vmatpush.msra.mxu0 0.0
    %289 = vmatpush.msra.mxu0 0.0
    %290 = vmatpush.msra.mxu0 0.0
    %291 = vmatpush.msra.mxu0 0.0
    %292 = vmatpush.msra.mxu0 0.0
    %293 = vmatpush.msra.mxu0 0.0
    %294 = vmatpush.msra.mxu0 0.0
    %v295 = vand.u32 %v87, 4294901760
    %296 = vmatpush.msra.mxu0 %v295
    %v297 = vand.u32 %v86, 4294901760
    %298 = vmatpush.msra.mxu0 %v297
    %v299 = vand.u32 %v85, 4294901760
    %300 = vmatpush.msra.mxu0 %v299
    %v301 = vand.u32 %v84, 4294901760
    %302 = vmatpush.msra.mxu0 %v301
    %v303 = vand.u32 %v121, 4294901760
    %304 = vmatmul.f32.gmra.mxu0 %v303
    %v305 = vpop.f32.mrf.mxu0
    %v306 = vadd.f32 %v281, %v305
    %307 = vdwg.mxu0
    %v316 = vperm.slane %v26, %v97
    %v317 = vperm.slane %v29, %v99
    %v318 = vsel %vm101, %v317, %v316
    %v319 = vperm.slane %v32, %v103
    %v320 = vsel %vm105, %v319, %v318
    %v321 = vperm.slane %v35, %v107
    %v322 = vsel %vm109, %v321, %v320
    %v323 = vperm.slane %v38, %v97
    %v324 = vperm.slane %v41, %v99
    %v325 = vsel %vm101, %v324, %v323
    %v326 = vperm.slane %v44, %v103
    %v327 = vsel %vm105, %v326, %v325
    %v328 = vperm.slane %v47, %v107
    %v329 = vsel %vm109, %v328, %v327
    %v330 = vsel %vm118, %v329, %v322
    %v331 = vsel %vm120, %v330, 0
    %333 = vmatpush.msra.mxu0 0.0
    %334 = vmatpush.msra.mxu0 0.0
    %335 = vmatpush.msra.mxu0 0.0
    %336 = vmatpush.msra.mxu0 0.0
    %337 = vmatpush.msra.mxu0 0.0
    %338 = vmatpush.msra.mxu0 0.0
    %339 = vmatpush.msra.mxu0 0.0
    %340 = vmatpush.msra.mxu0 0.0
    %341 = vmatpush.msra.mxu0 0.0
    %342 = vmatpush.msra.mxu0 0.0
    %343 = vmatpush.msra.mxu0 0.0
    %344 = vmatpush.msra.mxu0 0.0
    %v345 = vand.u32 %v83, 4294901760
    %346 = vmatpush.msra.mxu0 %v345
    %v347 = vand.u32 %v82, 4294901760
    %348 = vmatpush.msra.mxu0 %v347
    %v349 = vand.u32 %v81, 4294901760
    %350 = vmatpush.msra.mxu0 %v349
    %v351 = vand.u32 %v80, 4294901760
    %352 = vmatpush.msra.mxu0 %v351
    %v353 = vand.u32 %v331, 4294901760
    %v354 = vsub.f32 %v331, %v353
    %v355 = vand.u32 %v354, 4294901760
    %v356 = vsub.f32 %v354, %v355
    %v357 = vand.u32 %v356, 4294901760
    %358 = vmatmul.f32.gmra.mxu0 %v357
    %v359 = vpop.f32.mrf.mxu0
    %v360 = vadd.f32 %v306, %v359
    %361 = vdwg.mxu0
    %362 = vmatpush.msra.mxu0 0.0
    %363 = vmatpush.msra.mxu0 0.0
    %364 = vmatpush.msra.mxu0 0.0
    %365 = vmatpush.msra.mxu0 0.0
    %366 = vmatpush.msra.mxu0 0.0
    %367 = vmatpush.msra.mxu0 0.0
    %368 = vmatpush.msra.mxu0 0.0
    %369 = vmatpush.msra.mxu0 0.0
    %370 = vmatpush.msra.mxu0 0.0
    %371 = vmatpush.msra.mxu0 0.0
    %372 = vmatpush.msra.mxu0 0.0
    %373 = vmatpush.msra.mxu0 0.0
    %v374 = vand.u32 %v83, 4294901760
    %v375 = vsub.f32 %v83, %v374
    %v376 = vand.u32 %v375, 4294901760
    %v377 = vsub.f32 %v375, %v376
    %v378 = vand.u32 %v377, 4294901760
    %379 = vmatpush.msra.mxu0 %v378
    %v380 = vand.u32 %v82, 4294901760
    %v381 = vsub.f32 %v82, %v380
    %v382 = vand.u32 %v381, 4294901760
    %v383 = vsub.f32 %v381, %v382
    %v384 = vand.u32 %v383, 4294901760
    %385 = vmatpush.msra.mxu0 %v384
    %v386 = vand.u32 %v81, 4294901760
    %v387 = vsub.f32 %v81, %v386
    %v388 = vand.u32 %v387, 4294901760
    %v389 = vsub.f32 %v387, %v388
    %v390 = vand.u32 %v389, 4294901760
    %391 = vmatpush.msra.mxu0 %v390
    %v392 = vand.u32 %v80, 4294901760
    %v393 = vsub.f32 %v80, %v392
    %v394 = vand.u32 %v393, 4294901760
    %v395 = vsub.f32 %v393, %v394
    %v396 = vand.u32 %v395, 4294901760
    %397 = vmatpush.msra.mxu0 %v396
    %v398 = vand.u32 %v331, 4294901760
    %399 = vmatmul.f32.gmra.mxu0 %v398
    %v400 = vpop.f32.mrf.mxu0
    %v401 = vadd.f32 %v360, %v400
    %402 = vdwg.mxu0
    %403 = vmatpush.msra.mxu0 0.0
    %404 = vmatpush.msra.mxu0 0.0
    %405 = vmatpush.msra.mxu0 0.0
    %406 = vmatpush.msra.mxu0 0.0
    %407 = vmatpush.msra.mxu0 0.0
    %408 = vmatpush.msra.mxu0 0.0
    %409 = vmatpush.msra.mxu0 0.0
    %410 = vmatpush.msra.mxu0 0.0
    %411 = vmatpush.msra.mxu0 0.0
    %412 = vmatpush.msra.mxu0 0.0
    %413 = vmatpush.msra.mxu0 0.0
    %414 = vmatpush.msra.mxu0 0.0
    %v415 = vand.u32 %v83, 4294901760
    %v416 = vsub.f32 %v83, %v415
    %417 = vmatpush.msra.mxu0 %v416
    %v418 = vand.u32 %v82, 4294901760
    %v419 = vsub.f32 %v82, %v418
    %420 = vmatpush.msra.mxu0 %v419
    %v421 = vand.u32 %v81, 4294901760
    %v422 = vsub.f32 %v81, %v421
    %423 = vmatpush.msra.mxu0 %v422
    %v424 = vand.u32 %v80, 4294901760
    %v425 = vsub.f32 %v80, %v424
    %426 = vmatpush.msra.mxu0 %v425
    %v427 = vand.u32 %v331, 4294901760
    %v428 = vsub.f32 %v331, %v427
    %429 = vmatmul.f32.gmra.mxu0 %v428
    %v430 = vpop.f32.mrf.mxu0
    %v431 = vadd.f32 %v401, %v430
    %432 = vdwg.mxu0
    %433 = vmatpush.msra.mxu0 0.0
    %434 = vmatpush.msra.mxu0 0.0
    %435 = vmatpush.msra.mxu0 0.0
    %436 = vmatpush.msra.mxu0 0.0
    %437 = vmatpush.msra.mxu0 0.0
    %438 = vmatpush.msra.mxu0 0.0
    %439 = vmatpush.msra.mxu0 0.0
    %440 = vmatpush.msra.mxu0 0.0
    %441 = vmatpush.msra.mxu0 0.0
    %442 = vmatpush.msra.mxu0 0.0
    %443 = vmatpush.msra.mxu0 0.0
    %444 = vmatpush.msra.mxu0 0.0
    %v445 = vand.u32 %v83, 4294901760
    %446 = vmatpush.msra.mxu0 %v445
    %v447 = vand.u32 %v82, 4294901760
    %448 = vmatpush.msra.mxu0 %v447
    %v449 = vand.u32 %v81, 4294901760
    %450 = vmatpush.msra.mxu0 %v449
    %v451 = vand.u32 %v80, 4294901760
    %452 = vmatpush.msra.mxu0 %v451
    %v453 = vand.u32 %v331, 4294901760
    %v454 = vsub.f32 %v331, %v453
    %v455 = vand.u32 %v454, 4294901760
    %456 = vmatmul.f32.gmra.mxu0 %v455
    %v457 = vpop.f32.mrf.mxu0
    %v458 = vadd.f32 %v431, %v457
    %459 = vdwg.mxu0
    %460 = vmatpush.msra.mxu0 0.0
    %461 = vmatpush.msra.mxu0 0.0
    %462 = vmatpush.msra.mxu0 0.0
    %463 = vmatpush.msra.mxu0 0.0
    %464 = vmatpush.msra.mxu0 0.0
    %465 = vmatpush.msra.mxu0 0.0
    %466 = vmatpush.msra.mxu0 0.0
    %467 = vmatpush.msra.mxu0 0.0
    %468 = vmatpush.msra.mxu0 0.0
    %469 = vmatpush.msra.mxu0 0.0
    %470 = vmatpush.msra.mxu0 0.0
    %471 = vmatpush.msra.mxu0 0.0
    %v472 = vand.u32 %v83, 4294901760
    %v473 = vsub.f32 %v83, %v472
    %v474 = vand.u32 %v473, 4294901760
    %475 = vmatpush.msra.mxu0 %v474
    %v476 = vand.u32 %v82, 4294901760
    %v477 = vsub.f32 %v82, %v476
    %v478 = vand.u32 %v477, 4294901760
    %479 = vmatpush.msra.mxu0 %v478
    %v480 = vand.u32 %v81, 4294901760
    %v481 = vsub.f32 %v81, %v480
    %v482 = vand.u32 %v481, 4294901760
    %483 = vmatpush.msra.mxu0 %v482
    %v484 = vand.u32 %v80, 4294901760
    %v485 = vsub.f32 %v80, %v484
    %v486 = vand.u32 %v485, 4294901760
    %487 = vmatpush.msra.mxu0 %v486
    %v488 = vand.u32 %v331, 4294901760
    %489 = vmatmul.f32.gmra.mxu0 %v488
    %v490 = vpop.f32.mrf.mxu0
    %v491 = vadd.f32 %v458, %v490
    %492 = vdwg.mxu0
    %493 = vmatpush.msra.mxu0 0.0
    %494 = vmatpush.msra.mxu0 0.0
    %495 = vmatpush.msra.mxu0 0.0
    %496 = vmatpush.msra.mxu0 0.0
    %497 = vmatpush.msra.mxu0 0.0
    %498 = vmatpush.msra.mxu0 0.0
    %499 = vmatpush.msra.mxu0 0.0
    %500 = vmatpush.msra.mxu0 0.0
    %501 = vmatpush.msra.mxu0 0.0
    %502 = vmatpush.msra.mxu0 0.0
    %503 = vmatpush.msra.mxu0 0.0
    %504 = vmatpush.msra.mxu0 0.0
    %v505 = vand.u32 %v83, 4294901760
    %506 = vmatpush.msra.mxu0 %v505
    %v507 = vand.u32 %v82, 4294901760
    %508 = vmatpush.msra.mxu0 %v507
    %v509 = vand.u32 %v81, 4294901760
    %510 = vmatpush.msra.mxu0 %v509
    %v511 = vand.u32 %v80, 4294901760
    %512 = vmatpush.msra.mxu0 %v511
    %v513 = vand.u32 %v331, 4294901760
    %514 = vmatmul.f32.gmra.mxu0 %v513
    %v515 = vpop.f32.mrf.mxu0
    %v516 = vadd.f32 %v491, %v515
    %517 = vdwg.mxu0
    %v518 = vsub.f32 0.0, %v516
    %v519 = vmul.f32 %v518, 1.442695
    %v520 = vpow.pop %v519
    %v521 = vadd.f32 %v520, 1.0
    %v522 = vrcp.pop %v521
    %v523 = vmul.f32 %v521, %v522
    %v524 = vsub.f32 1.0, %v523
    %v525 = vmul.f32 %v522, %v524
    %v526 = vadd.f32 %v522, %v525
    %vm527 = vweird.f32 %v521
    %vm528 = vweird.f32 %v522
    %vm529 = vmor %vm527, %vm528
    %v530 = vsel %vm529, %v522, %v526
    %v531 = vand.u32 2147483647, %v521
    %vm532 = vcmp.eq.f32.partialorder %v531, 8.507059e+37
    %v533 = vand.u32 %v521, 2147483648
    %v534 = vor.u32 1.1754944e-38, %v533
    %v535 = vsel %vm532, %v534, %v530
    %v536 = vmul.f32 1.0, %v535
    %vm537 = vcmask 254976
    %538 = vst.msk [vmem:[#allocation2] sm:$0x3] %vm537, %v536
    // Predicated region
    $region14: #{spatial_attention_forward.1} parent=1 // pred_check
      _
    $region15: #{spatial_attention_forward.1} parent=1 // pred_check_branch
      %540 = sbr.rel (0) target = $region17
    $region16: #{spatial_attention_forward.1} parent=1 // pred_region
      %542 = vsyncadd [#allocation3], 0
      %s544 = sshll.u32 [#allocation2], 4
      %s545 = int_to_ptr.vmem [resolvable:$true] %s544
      %s546 = sshll.u32 %s3, 4
      %s547 = int_to_ptr.hbm [resolvable:$true] %s546
      %549 = dma.vmem_to_hbm [thread:$0]  %s545, 32, %s547, [#allocation3]
    $region17: #{spatial_attention_forward.1} parent=1 // pred_fallthru
      _
    // Predicated region
    $region18: #{spatial_attention_forward.1} parent=1 // pred_check
      _
    $region19: #{spatial_attention_forward.1} parent=1 // pred_check_branch
      %551 = sbr.rel (0) target = $region21
    $region20: #{spatial_attention_forward.1} parent=1 // pred_region
      %553 = dma.done [#allocation3], 32
    $region21: #{spatial_attention_forward.1} parent=1 // pred_fallthru
      _
    %554 = vsyncpa [#allocation3], 1

</llo_original>
